<compile_context>
chip_gen: v6e
topology: v6e:2x2x1
jax: 0.10.0
libtpu: 0.0.40
codegen_flags: <defaults>
</compile_context>

<pallas_src>
import jax
import jax.numpy as jnp
from jax.experimental import pallas as pl
from jax.experimental.pallas import tpu as pltpu

IN_FEATURES = 128
OUT_FEATURES = 256
_MIN_TILE_B = 512
_MAX_TILE_B = 4096  # ~20 MiB double-buffered f32 working set at 4096 rows


def linear_add_relu_kernel(x_ref, w_ref, b_ref, other_ref, o_ref):
    # x:(tb,128) f32   w:(128,256) f32 (resident)   b:(1,256) f32 (resident)
    # other:(tb,256) f32  ->  o:(tb,256) f32
    # bf16 cast happens in VMEM (no HBM cost); MXU accumulates in f32.
    y = jnp.dot(
        x_ref[...].astype(jnp.bfloat16),
        w_ref[...].astype(jnp.bfloat16),
        preferred_element_type=jnp.float32,
    )
    y = y + b_ref[...] + other_ref[...]            # bias + residual, all f32
    o_ref[...] = jnp.maximum(y, 0.0).astype(o_ref.dtype)


def _pick_tile_b(B: int) -> int:
    """Rows per grid step: whole batch if small, else ~8 steps, multiple of 8."""
    if B <= _MIN_TILE_B:
        return B  # single step; block == full dim satisfies the (8,128) rule
    target = -(-B // 8)            # ~8 grid steps total (>=4 per TC on v7x)
    target = ((target + 7) // 8) * 8
    return max(_MIN_TILE_B, min(_MAX_TILE_B, target))


def linear_add_relu(x, w, b, other):
    """relu(x @ w + b + other). x:(B,128) w:(128,256) b:(256,) other:(B,256) -> (B,256) f32."""
    B = x.shape[0]
    tb = _pick_tile_b(B)
    grid = (pl.cdiv(B, tb),)

    b2d = b.reshape(1, OUT_FEATURES).astype(jnp.float32)  # tiny, stays resident

    # VMEM budget: double-buffered streamed tiles (x, other, out) + resident W/b.
    elt = 4  # f32 bytes
    step_bytes = tb * (IN_FEATURES + 2 * OUT_FEATURES) * elt
    resident_bytes = (IN_FEATURES * OUT_FEATURES + OUT_FEATURES) * elt
    vmem_needed = 2 * step_bytes + 2 * resident_bytes
    vmem_limit = max(32 << 20, min(int(1.25 * vmem_needed) + (4 << 20), 56 << 20))

    cost = pl.CostEstimate(
        flops=2 * B * IN_FEATURES * OUT_FEATURES,
        transcendentals=0,
        bytes_accessed=(B * IN_FEATURES                      # x read
                        + IN_FEATURES * OUT_FEATURES          # W read
                        + OUT_FEATURES                        # bias read
                        + B * OUT_FEATURES                    # other read
                        + B * OUT_FEATURES) * elt,            # out write
    )

    # TODO(synk): input_output_aliases={3: 0} would let `other` (f32, same shape)
    # donate its HBM buffer to the output, but it changes the calling convention
    # (requires donation), so it is left to the caller.
    return pl.pallas_call(
        linear_add_relu_kernel,
        out_shape=jax.ShapeDtypeStruct((B, OUT_FEATURES), jnp.float32),
        grid=grid,
        in_specs=[
            pl.BlockSpec((tb, IN_FEATURES), lambda i: (i, 0)),             # x tile, streamed f32
            pl.BlockSpec((IN_FEATURES, OUT_FEATURES), lambda i: (0, 0)),   # W resident
            pl.BlockSpec((1, OUT_FEATURES), lambda i: (0, 0)),             # bias resident
            pl.BlockSpec((tb, OUT_FEATURES), lambda i: (i, 0)),            # residual tile, streamed f32
        ],
        out_specs=pl.BlockSpec((tb, OUT_FEATURES), lambda i: (i, 0)),
        compiler_params=pltpu.CompilerParams(
            dimension_semantics=("parallel",),       # megacore split on v7x
            vmem_limit_bytes=vmem_limit,
        ),
        cost_estimate=cost,
    )(x, w, b2d, other)


def _reference_f32(x, w, b, other):
    # Pure f32 reference (the PyTorch module's math).
    y = jnp.dot(x, w, preferred_element_type=jnp.float32) + b[None, :] + other
    return jnp.maximum(y, 0.0)


if __name__ == "__main__":
    key = jax.random.PRNGKey(0)
    kx, ko, kw, kb, kx2, ko2 = jax.random.split(key, 6)

    # Deterministic Linear(128, 256) params (PyTorch default init: U(-1/sqrt(in), 1/sqrt(in))).
    bound = 1.0 / (IN_FEATURES ** 0.5)
    w = jax.random.uniform(kw, (IN_FEATURES, OUT_FEATURES), jnp.float32, -bound, bound)
    b = jax.random.uniform(kb, (OUT_FEATURES,), jnp.float32, -bound, bound)

    # Case 1: exact module shapes (input = randn(1,128), other = randn(1,256)).
    x1 = jax.random.normal(kx, (1, IN_FEATURES), dtype=jnp.float32)
    o1 = jax.random.normal(ko, (1, OUT_FEATURES), dtype=jnp.float32)
    out1 = linear_add_relu(x1, w, b, o1)
    jax.block_until_ready(out1)
    ref1 = _reference_f32(x1, w, b, o1)
    assert out1.shape == (1, OUT_FEATURES)
    # bf16 MXU matmul (K=128) vs f32 reference: error is O(1e-3); 2e-2 is comfortable.
    assert jnp.allclose(out1, ref1, atol=2e-2, rtol=2e-2)

    # Case 2: larger batch to exercise the adaptive tiling / pipelined grid.
    B2 = 4096
    x2 = jax.random.normal(kx2, (B2, IN_FEATURES), dtype=jnp.float32)
    o2 = jax.random.normal(ko2, (B2, OUT_FEATURES), dtype=jnp.float32)
    out2 = linear_add_relu(x2, w, b, o2)
    jax.block_until_ready(out2)
    ref2 = _reference_f32(x2, w, b, o2)
    assert out2.shape == (B2, OUT_FEATURES)
    assert jnp.allclose(out2, ref2, atol=2e-2, rtol=2e-2)

    print("KERNEL_OK")
</pallas_src>

<mosaic_0001>
module attributes {stable_mosaic.version = 11 : i64} {
  func.func @linear_add_relu_kernel(%arg0: i32, %arg1: memref<1x128xf32, #tpu.memory_space<vmem>>, %arg2: memref<128x256xf32, #tpu.memory_space<vmem>>, %arg3: memref<1x256xf32, #tpu.memory_space<vmem>>, %arg4: memref<1x256xf32, #tpu.memory_space<vmem>>, %arg5: memref<1x256xf32, #tpu.memory_space<vmem>>) attributes {dimension_semantics = [#tpu.dimension_semantics<parallel>], iteration_bounds = array<i64: 1>, scalar_prefetch = 0 : i64, scratch_operands = 0 : i64, tpu.core_type = #tpu.core_type<tc>, window_params = [{transform_indices = @transform_0, window_bounds = array<i64: 1, 128>}, {pipeline_mode = #tpu.pipeline_mode<synchronous>, transform_indices = @transform_1, window_bounds = array<i64: 128, 256>}, {pipeline_mode = #tpu.pipeline_mode<synchronous>, transform_indices = @transform_2, window_bounds = array<i64: 1, 256>}, {transform_indices = @transform_3, window_bounds = array<i64: 1, 256>}, {transform_indices = @transform_4, window_bounds = array<i64: 1, 256>}]} {
    %c0 = arith.constant 0 : index
    %c0_0 = arith.constant 0 : index
    %0 = vector.load %arg1[%c0, %c0_0] : memref<1x128xf32, #tpu.memory_space<vmem>>, vector<1x128xf32>
    %1 = arith.truncf %0 : vector<1x128xf32> to vector<1x128xbf16>
    %c0_1 = arith.constant 0 : index
    %c0_2 = arith.constant 0 : index
    %2 = vector.load %arg2[%c0_1, %c0_2] : memref<128x256xf32, #tpu.memory_space<vmem>>, vector<128x256xf32>
    %3 = arith.truncf %2 : vector<128x256xf32> to vector<128x256xbf16>
    %cst = arith.constant dense<0.000000e+00> : vector<1x256xf32>
    %4 = tpu.matmul %1, %3, %cst {dimension_numbers = #tpu.dot_dimension_numbers<[1], [0], [0], [1], [0, 0, 1, 1], [], []>} : vector<1x128xbf16>, vector<128x256xbf16>, vector<1x256xf32> -> vector<1x256xf32>
    %c0_3 = arith.constant 0 : index
    %c0_4 = arith.constant 0 : index
    %5 = vector.load %arg3[%c0_3, %c0_4] : memref<1x256xf32, #tpu.memory_space<vmem>>, vector<1x256xf32>
    %6 = arith.addf %4, %5 : vector<1x256xf32>
    %c0_5 = arith.constant 0 : index
    %c0_6 = arith.constant 0 : index
    %7 = vector.load %arg4[%c0_5, %c0_6] : memref<1x256xf32, #tpu.memory_space<vmem>>, vector<1x256xf32>
    %8 = arith.addf %6, %7 : vector<1x256xf32>
    %cst_7 = arith.constant 0.000000e+00 : f32
    %9 = vector.broadcast %cst_7 : f32 to vector<1x256xf32>
    %10 = arith.maximumf %8, %9 : vector<1x256xf32>
    %c0_8 = arith.constant 0 : index
    %c0_9 = arith.constant 0 : index
    %11 = vector.load %arg5[%c0_8, %c0_9] : memref<1x256xf32, #tpu.memory_space<vmem>>, vector<1x256xf32>
    tpu.vector_store %arg5[%c0_8, %c0_9], %10 {strides = array<i32>} : memref<1x256xf32, #tpu.memory_space<vmem>>, vector<1x256xf32>,
    return
  }
  func.func @transform_0(%arg0: i32) -> (i32, i32) {
    %c0_i32 = arith.constant 0 : i32
    %c0_i32_0 = arith.constant 0 : i32
    return %arg0, %c0_i32 : i32, i32
  }
  func.func @transform_1(%arg0: i32) -> (i32, i32) {
    %c0_i32 = arith.constant 0 : i32
    %c0_i32_0 = arith.constant 0 : i32
    %c0_i32_1 = arith.constant 0 : i32
    return %c0_i32, %c0_i32_0 : i32, i32
  }
  func.func @transform_2(%arg0: i32) -> (i32, i32) {
    %c0_i32 = arith.constant 0 : i32
    %c0_i32_0 = arith.constant 0 : i32
    %c0_i32_1 = arith.constant 0 : i32
    return %c0_i32, %c0_i32_0 : i32, i32
  }
  func.func @transform_3(%arg0: i32) -> (i32, i32) {
    %c0_i32 = arith.constant 0 : i32
    %c0_i32_0 = arith.constant 0 : i32
    return %arg0, %c0_i32 : i32, i32
  }
  func.func @transform_4(%arg0: i32) -> (i32, i32) {
    %c0_i32 = arith.constant 0 : i32
    %c0_i32_0 = arith.constant 0 : i32
    return %arg0, %c0_i32 : i32, i32
  }
}

</mosaic_0001>

<llo_original>
// kernel: tpu_custom_call.1
$region0: #{tpu_custom_call.1}
  #allocation0 [shape = 'u32[]', space=smem, size = 0x4, offset = 0x4, fixed_abs, tag = 'smem constant byte address 0x4 - core index']
  #allocation1 [shape = 'u32[144,128]{1,0:T(1,128)}', space=vmem, size = 0x12000, scoped, tag = 'internal scratch']
  %s0 = inlined_call_operand.hbm [shape: f32[1,128], index: 0, kind: input, shape index: {}]
  %s1 = inlined_call_operand.hbm [shape: f32[128,256], index: 1, kind: input, shape index: {}]
  %s2 = inlined_call_operand.vmem [shape: f32[1,256], index: 2, kind: input, shape index: {}]
  %s3 = inlined_call_operand.vmem [shape: f32[1,256], index: 3, kind: input, shape index: {}]
  %s4 = inlined_call_operand.hbm [shape: f32[1,256], index: 4, kind: output, shape index: {}]
  %s5 = sld [smem:[#allocation0]]
  $region34: #{tpu_custom_call.1} parent=0
    _
  %s7 = ssub.s32 1, %s5
  %s8 = scalar_select 0, %s7, %s5
  $region1: #{tpu_custom_call.1} parent=0
    #allocation2 [shape = 'u8[512]{0}', space=vmem, size = 0x400, scoped, tag = 'input window, operand 0, single buffered']
    #allocation3 [shape = 's32[1]{0}', space=sflag, size = 0x4, scoped, tag = 'scoped memory for tpu_custom_call.1']
    #allocation4 [shape = 's32[1]{0}', space=sflag, size = 0x4, scoped, tag = 'scoped memory for tpu_custom_call.1']
    #allocation5 [shape = 'u8[131072]{0}', space=vmem, size = 0x20000, scoped, tag = 'input window, operand 1, single buffered']
    #allocation6 [shape = 's32[1]{0}', space=sflag, size = 0x4, scoped, tag = 'scoped memory for tpu_custom_call.1']
    #allocation7 [shape = 'u8[1024]{0}', space=vmem, size = 0x400, scoped, tag = 'output window, operand 0, single buffered']
    %9 = vsyncpa [#allocation3], 0
    %10 = vsyncpa [#allocation6], 0
    %11 = vsyncpa [#allocation4], 0
    // Predicated region
    $region2: #{tpu_custom_call.1} parent=1 // pred_check
      _
    $region3: #{tpu_custom_call.1} parent=1 // pred_check_branch
      %13 = sbr.rel (0) target = $region5
    $region4: #{tpu_custom_call.1} parent=1 // pred_region
      %s15 = ssub.s32 16, 16
      %16 = vsyncadd [#allocation3], %s15
      %s18 = sshll.u32 [#allocation2], 4
      %s19 = int_to_ptr.vmem [resolvable:$true] %s18
      %21 = dma.hbm_to_vmem [thread:$0]  %s0, 16, %s19, [#allocation3]
    $region5: #{tpu_custom_call.1} parent=1 // pred_fallthru
      _
    // Predicated region
    $region6: #{tpu_custom_call.1} parent=1 // pred_check
      _
    $region7: #{tpu_custom_call.1} parent=1 // pred_check_branch
      %23 = sbr.rel (0) target = $region9
    $region8: #{tpu_custom_call.1} parent=1 // pred_region
      %s25 = ssub.s32 4096, 4096
      %26 = vsyncadd [#allocation6], %s25
      %s27 = sshll.u32 [#allocation5], 4
      %s28 = int_to_ptr.vmem [resolvable:$true] %s27
      %33 = dma.hbm_to_vmem [thread:$0]  %s1, 4096, %s28, [#allocation6], 256, 256, 16
    $region9: #{tpu_custom_call.1} parent=1 // pred_fallthru
      _
    // Predicated region
    $region10: #{tpu_custom_call.1} parent=1 // pred_check
      _
    $region11: #{tpu_custom_call.1} parent=1 // pred_check_branch
      %35 = sbr.rel (0) target = $region13
    $region12: #{tpu_custom_call.1} parent=1 // pred_region
      _
    $region13: #{tpu_custom_call.1} parent=1 // pred_fallthru
      _
    // Predicated region
    $region14: #{tpu_custom_call.1} parent=1 // pred_check
      _
    $region15: #{tpu_custom_call.1} parent=1 // pred_check_branch
      %37 = sbr.rel (0) target = $region17
    $region16: #{tpu_custom_call.1} parent=1 // pred_region
      _
    $region17: #{tpu_custom_call.1} parent=1 // pred_fallthru
      _
    // Predicated region
    $region18: #{tpu_custom_call.1} parent=1 // pred_check
      _
    $region19: #{tpu_custom_call.1} parent=1 // pred_check_branch
      %39 = sbr.rel (0) target = $region21
    $region20: #{tpu_custom_call.1} parent=1 // pred_region
      %40 = dma.done [#allocation3], 16
    $region21: #{tpu_custom_call.1} parent=1 // pred_fallthru
      _
    // Predicated region
    $region22: #{tpu_custom_call.1} parent=1 // pred_check
      _
    $region23: #{tpu_custom_call.1} parent=1 // pred_check_branch
      %42 = sbr.rel (0) target = $region25
    $region24: #{tpu_custom_call.1} parent=1 // pred_region
      %43 = dma.done [#allocation6], 4096
    $region25: #{tpu_custom_call.1} parent=1 // pred_fallthru
      _
    %v45 = vld [vmem:[#allocation2] sm:$0x1]
    %v46 = vpack.c.bf16 %v45, %v45
    %v47 = vld [vmem:[#allocation5] sm:$0xff]
    %v48 = vld [vmem:[#allocation5 + $0x8] sm:$0xff]
    %v49 = vld [vmem:[#allocation5 + $0x10] sm:$0xff]
    %v50 = vld [vmem:[#allocation5 + $0x18] sm:$0xff]
    %v51 = vld [vmem:[#allocation5 + $0x20] sm:$0xff]
    %v52 = vld [vmem:[#allocation5 + $0x28] sm:$0xff]
    %v53 = vld [vmem:[#allocation5 + $0x30] sm:$0xff]
    %v54 = vld [vmem:[#allocation5 + $0x38] sm:$0xff]
    %v55 = vld [vmem:[#allocation5 + $0x40] sm:$0xff]
    %v56 = vld [vmem:[#allocation5 + $0x48] sm:$0xff]
    %v57 = vld [vmem:[#allocation5 + $0x50] sm:$0xff]
    %v58 = vld [vmem:[#allocation5 + $0x58] sm:$0xff]
    %v59 = vld [vmem:[#allocation5 + $0x60] sm:$0xff]
    %v60 = vld [vmem:[#allocation5 + $0x68] sm:$0xff]
    %v61 = vld [vmem:[#allocation5 + $0x70] sm:$0xff]
    %v62 = vld [vmem:[#allocation5 + $0x78] sm:$0xff]
    %v63 = vld [vmem:[#allocation5 + $0x80] sm:$0xff]
    %v64 = vld [vmem:[#allocation5 + $0x88] sm:$0xff]
    %v65 = vld [vmem:[#allocation5 + $0x90] sm:$0xff]
    %v66 = vld [vmem:[#allocation5 + $0x98] sm:$0xff]
    %v67 = vld [vmem:[#allocation5 + $0xa0] sm:$0xff]
    %v68 = vld [vmem:[#allocation5 + $0xa8] sm:$0xff]
    %v69 = vld [vmem:[#allocation5 + $0xb0] sm:$0xff]
    %v70 = vld [vmem:[#allocation5 + $0xb8] sm:$0xff]
    %v71 = vld [vmem:[#allocation5 + $0xc0] sm:$0xff]
    %v72 = vld [vmem:[#allocation5 + $0xc8] sm:$0xff]
    %v73 = vld [vmem:[#allocation5 + $0xd0] sm:$0xff]
    %v74 = vld [vmem:[#allocation5 + $0xd8] sm:$0xff]
    %v75 = vld [vmem:[#allocation5 + $0xe0] sm:$0xff]
    %v76 = vld [vmem:[#allocation5 + $0xe8] sm:$0xff]
    %v77 = vld [vmem:[#allocation5 + $0xf0] sm:$0xff]
    %v78 = vld [vmem:[#allocation5 + $0xf8] sm:$0xff]
    %v79 = vpack.c.bf16 %v49, %v47
    %v80 = vpack.c.bf16 %v50, %v48
    %v81 = vpack.c.bf16 %v53, %v51
    %v82 = vpack.c.bf16 %v54, %v52
    %v83 = vpack.c.bf16 %v57, %v55
    %v84 = vpack.c.bf16 %v58, %v56
    %v85 = vpack.c.bf16 %v61, %v59
    %v86 = vpack.c.bf16 %v62, %v60
    %v87 = vpack.c.bf16 %v65, %v63
    %v88 = vpack.c.bf16 %v66, %v64
    %v89 = vpack.c.bf16 %v69, %v67
    %v90 = vpack.c.bf16 %v70, %v68
    %v91 = vpack.c.bf16 %v73, %v71
    %v92 = vpack.c.bf16 %v74, %v72
    %v93 = vpack.c.bf16 %v77, %v75
    %v94 = vpack.c.bf16 %v78, %v76
    %v95 = vld [vmem:[%s2] sm:$0x3]
    %v97 = vlaneseq
    %v98 = vshrl.u32 %v97, 7
    %v99 = vsub.s32 0, %v98
    %v100 = vrot.slane %v95, %v99
    %v101 = vlaneseq
    %v102 = vshrl.u32 %v101, 7
    %v103 = vsub.s32 1, %v102
    %v104 = vrot.slane %v95, %v103
    %107 = vmatprep.subr.bf16.mxu0 %v94
    %108 = vmatpush1.bf16.msra.mxu0 %v93
    %109 = vmatprep.subr.bf16.mxu0 %v92
    %110 = vmatpush1.bf16.msra.mxu0 %v91
    %111 = vmatprep.subr.bf16.mxu0 %v90
    %112 = vmatpush1.bf16.msra.mxu0 %v89
    %113 = vmatprep.subr.bf16.mxu0 %v88
    %114 = vmatpush1.bf16.msra.mxu0 %v87
    %115 = vmatprep.subr.bf16.mxu0 %v86
    %116 = vmatpush1.bf16.msra.mxu0 %v85
    %117 = vmatprep.subr.bf16.mxu0 %v84
    %118 = vmatpush1.bf16.msra.mxu0 %v83
    %119 = vmatprep.subr.bf16.mxu0 %v82
    %120 = vmatpush1.bf16.msra.mxu0 %v81
    %121 = vmatprep.subr.bf16.mxu0 %v80
    %122 = vmatpush1.bf16.msra.mxu0 %v79
    %123 = vmatprep.subr.bf16.mxu0 0
    %124 = vmatpush2.bf16.msra.mxu0 0
    %125 = vmatprep.subr.bf16.mxu0 0
    %126 = vmatpush2.bf16.msra.mxu0 0
    %127 = vmatprep.subr.bf16.mxu0 0
    %128 = vmatpush2.bf16.msra.mxu0 0
    %129 = vmatprep.subr.bf16.mxu0 0
    %130 = vmatpush2.bf16.msra.mxu0 0
    %131 = vmatprep.subr.bf16.mxu0 0
    %132 = vmatpush2.bf16.msra.mxu0 0
    %133 = vmatprep.subr.bf16.mxu0 0
    %134 = vmatpush2.bf16.msra.mxu0 0
    %135 = vmatprep.subr.bf16.mxu0 0
    %136 = vmatpush2.bf16.msra.mxu0 0
    %137 = vmatprep.subr.bf16.mxu0 0
    %138 = vmatpush2.bf16.msra.mxu0 0
    %139 = vmatprep.mubr.bf16.mxu0 0
    %140 = vmatmul.mubr.bf16.gmra.mxu0 %v46
    %v141 = vpop.f32.mrf.mxu0
    %v142 = vadd.f32 %v100, %v141
    %v143 = vpop.f32.mrf.mxu0
    %v144 = vadd.f32 %v104, %v143
    %v145 = vpop.f32.mrf.mxu0
    %v146 = vpop.f32.mrf.mxu0
    %147 = vdwg.mxu0
    %v148 = vld [vmem:[%s3] sm:$0x3]
    %v150 = vlaneseq
    %v151 = vshrl.u32 %v150, 7
    %v152 = vsub.s32 0, %v151
    %v153 = vrot.slane %v148, %v152
    %v154 = vlaneseq
    %v155 = vshrl.u32 %v154, 7
    %v156 = vsub.s32 1, %v155
    %v157 = vrot.slane %v148, %v156
    %v160 = vadd.f32 %v142, %v153
    %v161 = vadd.f32 %v144, %v157
    %v162 = vmax.f32 %v160, 0.0
    %v163 = vmax.f32 %v161, 0.0
    %v166 = vcombine.low %v162, %v163
    %v168 = vunpack.c.l.s4 1966171168
    %v169 = vunpack.c.0.s8 %v168
    %v170 = vlaneseq
    %v171 = vshrl.u32 %v170, 7
    %v172 = vsub.s32 %v169, %v171
    %v173 = vrot.slane %v166, %v172
    %v175 = vunpack.c.l.s4 1966171168
    %v176 = vunpack.c.0.s8 %v175
    %v177 = vlaneseq
    %v178 = vshrl.u32 %v177, 7
    %v179 = vsub.s32 %v176, %v178
    %v180 = vrot.slane %v173, %v179
    %v182 = vlaneseq
    %vm183 = vcmp.ge.s32.totalorder %v182, 0
    %vm184 = vcmp.lt.s32.totalorder %v182, 256
    %vm185 = vmand %vm183, %vm184
    %186 = vst.msk [vmem:[#allocation7] sm:$0x3] %vm185, %v180
    // Predicated region
    $region26: #{tpu_custom_call.1} parent=1 // pred_check
      _
    $region27: #{tpu_custom_call.1} parent=1 // pred_check_branch
      %188 = sbr.rel (0) target = $region29
    $region28: #{tpu_custom_call.1} parent=1 // pred_region
      %s190 = ssub.s32 32, 32
      %191 = vsyncadd [#allocation4], %s190
      %s193 = sshll.u32 [#allocation7], 4
      %s194 = int_to_ptr.vmem [resolvable:$true] %s193
      %196 = dma.vmem_to_hbm [thread:$0]  %s194, 32, %s4, [#allocation4]
    $region29: #{tpu_custom_call.1} parent=1 // pred_fallthru
      _
    // Predicated region
    $region30: #{tpu_custom_call.1} parent=1 // pred_check
      _
    $region31: #{tpu_custom_call.1} parent=1 // pred_check_branch
      %198 = sbr.rel (0) target = $region33
    $region32: #{tpu_custom_call.1} parent=1 // pred_region
      %199 = dma.done [#allocation4], 32
    $region33: #{tpu_custom_call.1} parent=1 // pred_fallthru
      _
    %200 = vsyncpa [#allocation3], 1
    %201 = vsyncpa [#allocation6], 1
    %202 = vsyncpa [#allocation4], 1

</llo_original>
